<compile_context>
chip_gen: v6e
topology: v6e:2x2x1
jax: 0.10.0
libtpu: 0.0.40
codegen_flags: <defaults>
</compile_context>

<pallas_src>
import functools

import jax
import jax.numpy as jnp
from jax.experimental import pallas as pl
from jax.experimental.pallas import tpu as pltpu


def _lstm_decoder_kernel(gx_ref, w_hh_ref, w_dec_ref, b_dec_ref, y_ref, hs_scr,
                         *, t_steps, bb):
    """Whole LSTM recurrence for one batch block, fused with the Linear decoder.

    gx_ref : (T*BB, 4H)  precomputed x@W_ih + b, time-major (rows t*BB .. t*BB+BB-1)
    y_ref  : (T*BB, Dout)
    hs_scr : (T*BB, H)   VMEM scratch holding all hidden states of this block
    """
    H = w_hh_ref.shape[0]

    # Hoist resident operands out of the loop (JAX does not CSE broadcasts).
    w_hh = w_hh_ref[...]
    w_dec = w_dec_ref[...]
    b_dec = b_dec_ref[...]

    def step(t, carry):
        h, c = carry
        row = pl.multiple_of(t * bb, bb)            # aligned dynamic offset
        # Only the recurrent matmul stays on the serial path.
        gates = gx_ref[pl.ds(row, bb), :] + jnp.dot(
            h, w_hh, preferred_element_type=jnp.float32)

        # PyTorch gate order: input, forget, cell(g), output.
        if_g = jax.nn.sigmoid(gates[:, :2 * H])     # i and f in one EUP pass
        i_g = if_g[:, :H]
        f_g = if_g[:, H:]
        g_g = jnp.tanh(gates[:, 2 * H:3 * H])
        o_g = jax.nn.sigmoid(gates[:, 3 * H:])

        c_new = f_g * c + i_g * g_g
        h_new = o_g * jnp.tanh(c_new)

        hs_scr[pl.ds(row, bb), :] = h_new
        return h_new, c_new

    h0 = jnp.zeros((bb, H), jnp.float32)
    c0 = jnp.zeros((bb, H), jnp.float32)
    jax.lax.fori_loop(0, t_steps, step, (h0, c0), unroll=True)

    # Fused decoder: one lane-friendly (T*BB, H) @ (H, Dout) matmul, single store.
    y_ref[...] = (jnp.dot(hs_scr[...], w_dec, preferred_element_type=jnp.float32)
                  + b_dec).astype(y_ref.dtype)


def peptide2rt_forward(x, params):
    """x: [B, T, D] float32 (batch-first). Returns decoder(LSTM(x)): [B, T, Dout]."""
    B, T, D = x.shape
    H = params["w_hh"].shape[0]
    Dout = params["w_dec"].shape[1]

    # ---- batch padding / blocking -------------------------------------------
    # Pad batch rows to a multiple of 8 (f32 sublanes); tile big batches into
    # 128-row blocks so the grid's "parallel" axis can use both v7x TensorCores.
    if B <= 128:
        BB = max(8, -(-B // 8) * 8)
    else:
        BB = 128
    Bp = -(-B // BB) * BB
    nb = Bp // BB
    if Bp != B:
        x = jnp.pad(x, ((0, Bp - B), (0, 0), (0, 0)))

    # ---- hoisted input projection (no loop-carried dep) ---------------------
    # One batched MXU matmul; the batch-first -> time-major layout change is
    # fused into it by XLA, so no standalone transpose of x.
    gx = jnp.einsum("btd,dg->tbg", x, params["w_ih"],
                    preferred_element_type=jnp.float32) + params["b"]
    # [T, Bp, 4H] -> [nb, T*BB, 4H]; block i holds batch rows i*BB:(i+1)*BB,
    # laid out time-major inside the block.
    gx = gx.reshape(T, nb, BB, 4 * H).transpose(1, 0, 2, 3).reshape(nb, T * BB, 4 * H)

    kernel = functools.partial(_lstm_decoder_kernel, t_steps=T, bb=BB)

    y_blk = pl.pallas_call(
        kernel,
        out_shape=jax.ShapeDtypeStruct((nb, T * BB, Dout), jnp.float32),
        grid_spec=pltpu.PrefetchScalarGridSpec(
            num_scalar_prefetch=0,
            grid=(nb,),                                   # independent batch blocks
            in_specs=[
                pl.BlockSpec((None, T * BB, 4 * H), lambda i: (i, 0, 0)),  # gates_x
                pl.BlockSpec((H, 4 * H), lambda i: (0, 0)),                # W_hh (resident)
                pl.BlockSpec((H, Dout), lambda i: (0, 0)),                 # decoder weight
                pl.BlockSpec((1, Dout), lambda i: (0, 0)),                 # decoder bias
            ],
            out_specs=pl.BlockSpec((None, T * BB, Dout), lambda i: (i, 0, 0)),
            scratch_shapes=[
                pltpu.VMEM((T * BB, H), jnp.float32),     # all hidden states of the block
            ],
        ),
        compiler_params=pltpu.CompilerParams(
            dimension_semantics=("parallel",),            # batch blocks -> megacore on v7x
        ),
    )(gx, params["w_hh"], params["w_dec"], params["b_dec"])

    # [nb, T*BB, Dout] -> [B, T, Dout]  (pure metadata/cheap permute at nb == 1)
    y = y_blk.reshape(nb, T, BB, Dout).transpose(0, 2, 1, 3).reshape(Bp, T, Dout)
    return y[:B]


def peptide2rt_reference(x, params):
    """Pure-JAX reference (mirrors nn.LSTM(batch_first=True) + nn.Linear)."""
    B, _, _ = x.shape
    H = params["w_hh"].shape[0]

    def step(carry, x_t):
        h, c = carry
        gates = x_t @ params["w_ih"] + h @ params["w_hh"] + params["b"]
        i_g, f_g, g_g, o_g = jnp.split(gates, 4, axis=-1)
        i_g = jax.nn.sigmoid(i_g)
        f_g = jax.nn.sigmoid(f_g)
        g_g = jnp.tanh(g_g)
        o_g = jax.nn.sigmoid(o_g)
        c = f_g * c + i_g * g_g
        h = o_g * jnp.tanh(c)
        return (h, c), h

    h0 = jnp.zeros((B, H), jnp.float32)
    c0 = jnp.zeros((B, H), jnp.float32)
    (_, _), hs = jax.lax.scan(step, (h0, c0), jnp.transpose(x, (1, 0, 2)))
    y = hs @ params["w_dec"] + params["b_dec"]          # [T, B, Dout]
    return jnp.transpose(y, (1, 0, 2))                  # [B, T, Dout]


def init_params(key, input_dim, hidden, out_dim):
    """Deterministic init matching PyTorch LSTM/Linear shapes (U(-1/sqrt(H), 1/sqrt(H))).

    Weights are stored pre-transposed: w_ih = weight_ih_l0.T, w_hh = weight_hh_l0.T,
    b = bias_ih_l0 + bias_hh_l0, w_dec = decoder.weight.T, b_dec = decoder.bias.
    """
    ks = jax.random.split(key, 6)
    s = 1.0 / jnp.sqrt(hidden)
    u = lambda k, shape: jax.random.uniform(k, shape, jnp.float32, -s, s)
    return {
        "w_ih": u(ks[0], (input_dim, 4 * hidden)),
        "w_hh": u(ks[1], (hidden, 4 * hidden)),
        "b":    u(ks[2], (1, 4 * hidden)),
        "w_dec": u(ks[3], (hidden, out_dim)),
        "b_dec": u(ks[4], (1, out_dim)),
    }


if __name__ == "__main__":
    key = jax.random.PRNGKey(0)
    kx, kp, kx2 = jax.random.split(key, 3)

    # peptide-ish small shapes: 20 amino-acid features, short sequence.
    B, T, D, H, DOUT = 2, 8, 20, 32, 1
    params = init_params(kp, D, H, DOUT)

    # Main check (exercises batch padding 2 -> 8, single batch block).
    x = jax.random.normal(kx, (B, T, D), jnp.float32)
    y = jax.block_until_ready(peptide2rt_forward(x, params))
    y_ref = peptide2rt_reference(x, params)
    assert y.shape == (B, T, DOUT), y.shape
    assert jnp.allclose(y, y_ref, rtol=1e-3, atol=1e-3), (
        float(jnp.max(jnp.abs(y - y_ref))))

    # Multi-block check (exercises the parallel batch-block grid path, B > 128).
    B2 = 136
    x2 = jax.random.normal(kx2, (B2, T, D), jnp.float32)
    y2 = jax.block_until_ready(peptide2rt_forward(x2, params))
    y2_ref = peptide2rt_reference(x2, params)
    assert y2.shape == (B2, T, DOUT), y2.shape
    assert jnp.allclose(y2, y2_ref, rtol=1e-3, atol=1e-3), (
        float(jnp.max(jnp.abs(y2 - y2_ref))))

    print("KERNEL_OK")
</pallas_src>

<mosaic_0001>
module attributes {stable_mosaic.version = 11 : i64} {
  func.func @_lstm_decoder_kernel(%arg0: i32, %arg1: memref<1x64x128xf32, #tpu.memory_space<vmem>>, %arg2: memref<32x128xf32, #tpu.memory_space<vmem>>, %arg3: memref<32x1xf32, #tpu.memory_space<vmem>>, %arg4: memref<1x1xf32, #tpu.memory_space<vmem>>, %arg5: memref<1x64x1xf32, #tpu.memory_space<vmem>>, %arg6: memref<64x32xf32, #tpu.memory_space<vmem>>) attributes {dimension_semantics = [#tpu.dimension_semantics<parallel>], iteration_bounds = array<i64: 1>, scalar_prefetch = 0 : i64, scratch_operands = 1 : i64, tpu.core_type = #tpu.core_type<tc>, window_params = [{transform_indices = @transform_0, window_bounds = array<i64: 1, 64, 128>}, {pipeline_mode = #tpu.pipeline_mode<synchronous>, transform_indices = @transform_1, window_bounds = array<i64: 32, 128>}, {pipeline_mode = #tpu.pipeline_mode<synchronous>, transform_indices = @transform_2, window_bounds = array<i64: 32, 1>}, {pipeline_mode = #tpu.pipeline_mode<synchronous>, transform_indices = @transform_3, window_bounds = array<i64: 1, 1>}, {transform_indices = @transform_4, window_bounds = array<i64: 1, 64, 1>}]} {
    %c0 = arith.constant 0 : index
    %c0_0 = arith.constant 0 : index
    %0 = vector.load %arg2[%c0, %c0_0] : memref<32x128xf32, #tpu.memory_space<vmem>>, vector<32x128xf32>
    %c0_1 = arith.constant 0 : index
    %c0_2 = arith.constant 0 : index
    %1 = vector.load %arg3[%c0_1, %c0_2] : memref<32x1xf32, #tpu.memory_space<vmem>>, vector<32x1xf32>
    %c0_3 = arith.constant 0 : index
    %c0_4 = arith.constant 0 : index
    %2 = vector.load %arg4[%c0_3, %c0_4] : memref<1x1xf32, #tpu.memory_space<vmem>>, vector<1x1xf32>
    %cst = arith.constant 0.000000e+00 : f32
    %3 = vector.broadcast %cst : f32 to vector<8x32xf32>
    %cst_5 = arith.constant 0.000000e+00 : f32
    %4 = vector.broadcast %cst_5 : f32 to vector<8x32xf32>
    %c0_i32 = arith.constant 0 : i32
    %c8_i32 = arith.constant 8 : i32
    %5 = arith.muli %c0_i32, %c8_i32 : i32
    %6 = tpu.assume_multiple %5, 8 : i32
    %c0_6 = arith.constant 0 : index
    %7 = arith.index_cast %6 : i32 to index
    %c0_7 = arith.constant 0 : index
    %8 = vector.load %arg1[%c0_6, %7, %c0_7] : memref<1x64x128xf32, #tpu.memory_space<vmem>>, vector<1x8x128xf32>
    %9 = vector.shape_cast %8 : vector<1x8x128xf32> to vector<8x128xf32>
    %cst_8 = arith.constant dense<0.000000e+00> : vector<8x128xf32>
    %10 = tpu.matmul %3, %0, %cst_8 {dimension_numbers = #tpu.dot_dimension_numbers<[1], [0], [0], [1], [0, 0, 1, 1], [], []>} : vector<8x32xf32>, vector<32x128xf32>, vector<8x128xf32> -> vector<8x128xf32>
    %11 = arith.addf %9, %10 : vector<8x128xf32>
    %12 = vector.extract_strided_slice %11 {offsets = [0, 0], sizes = [8, 64], strides = [1, 1]} : vector<8x128xf32> to vector<8x64xf32>
    %13 = arith.negf %12 : vector<8x64xf32>
    %14 = math.exp %13 : vector<8x64xf32>
    %cst_9 = arith.constant 1.000000e+00 : f32
    %15 = vector.broadcast %cst_9 : f32 to vector<8x64xf32>
    %16 = arith.addf %15, %14 : vector<8x64xf32>
    %17 = arith.divf %15, %16 : vector<8x64xf32>
    %18 = vector.extract_strided_slice %17 {offsets = [0, 0], sizes = [8, 32], strides = [1, 1]} : vector<8x64xf32> to vector<8x32xf32>
    %19 = vector.extract_strided_slice %17 {offsets = [0, 32], sizes = [8, 32], strides = [1, 1]} : vector<8x64xf32> to vector<8x32xf32>
    %20 = vector.extract_strided_slice %11 {offsets = [0, 64], sizes = [8, 32], strides = [1, 1]} : vector<8x128xf32> to vector<8x32xf32>
    %21 = math.tanh %20 : vector<8x32xf32>
    %22 = vector.extract_strided_slice %11 {offsets = [0, 96], sizes = [8, 32], strides = [1, 1]} : vector<8x128xf32> to vector<8x32xf32>
    %23 = arith.negf %22 : vector<8x32xf32>
    %24 = math.exp %23 : vector<8x32xf32>
    %cst_10 = arith.constant 1.000000e+00 : f32
    %25 = vector.broadcast %cst_10 : f32 to vector<8x32xf32>
    %26 = arith.addf %25, %24 : vector<8x32xf32>
    %27 = arith.divf %25, %26 : vector<8x32xf32>
    %28 = arith.mulf %19, %4 : vector<8x32xf32>
    %29 = arith.mulf %18, %21 : vector<8x32xf32>
    %30 = arith.addf %28, %29 : vector<8x32xf32>
    %31 = math.tanh %30 : vector<8x32xf32>
    %32 = arith.mulf %27, %31 : vector<8x32xf32>
    %33 = arith.index_cast %6 : i32 to index
    %c0_11 = arith.constant 0 : index
    %34 = vector.load %arg6[%33, %c0_11] : memref<64x32xf32, #tpu.memory_space<vmem>>, vector<8x32xf32>
    tpu.vector_store %arg6[%33, %c0_11], %32 {strides = array<i32>} : memref<64x32xf32, #tpu.memory_space<vmem>>, vector<8x32xf32>,
    %c1_i32 = arith.constant 1 : i32
    %c8_i32_12 = arith.constant 8 : i32
    %35 = arith.muli %c1_i32, %c8_i32_12 : i32
    %36 = tpu.assume_multiple %35, 8 : i32
    %c0_13 = arith.constant 0 : index
    %37 = arith.index_cast %36 : i32 to index
    %c0_14 = arith.constant 0 : index
    %38 = vector.load %arg1[%c0_13, %37, %c0_14] : memref<1x64x128xf32, #tpu.memory_space<vmem>>, vector<1x8x128xf32>
    %39 = vector.shape_cast %38 : vector<1x8x128xf32> to vector<8x128xf32>
    %cst_15 = arith.constant dense<0.000000e+00> : vector<8x128xf32>
    %40 = tpu.matmul %32, %0, %cst_15 {dimension_numbers = #tpu.dot_dimension_numbers<[1], [0], [0], [1], [0, 0, 1, 1], [], []>} : vector<8x32xf32>, vector<32x128xf32>, vector<8x128xf32> -> vector<8x128xf32>
    %41 = arith.addf %39, %40 : vector<8x128xf32>
    %42 = vector.extract_strided_slice %41 {offsets = [0, 0], sizes = [8, 64], strides = [1, 1]} : vector<8x128xf32> to vector<8x64xf32>
    %43 = arith.negf %42 : vector<8x64xf32>
    %44 = math.exp %43 : vector<8x64xf32>
    %cst_16 = arith.constant 1.000000e+00 : f32
    %45 = vector.broadcast %cst_16 : f32 to vector<8x64xf32>
    %46 = arith.addf %45, %44 : vector<8x64xf32>
    %47 = arith.divf %45, %46 : vector<8x64xf32>
    %48 = vector.extract_strided_slice %47 {offsets = [0, 0], sizes = [8, 32], strides = [1, 1]} : vector<8x64xf32> to vector<8x32xf32>
    %49 = vector.extract_strided_slice %47 {offsets = [0, 32], sizes = [8, 32], strides = [1, 1]} : vector<8x64xf32> to vector<8x32xf32>
    %50 = vector.extract_strided_slice %41 {offsets = [0, 64], sizes = [8, 32], strides = [1, 1]} : vector<8x128xf32> to vector<8x32xf32>
    %51 = math.tanh %50 : vector<8x32xf32>
    %52 = vector.extract_strided_slice %41 {offsets = [0, 96], sizes = [8, 32], strides = [1, 1]} : vector<8x128xf32> to vector<8x32xf32>
    %53 = arith.negf %52 : vector<8x32xf32>
    %54 = math.exp %53 : vector<8x32xf32>
    %cst_17 = arith.constant 1.000000e+00 : f32
    %55 = vector.broadcast %cst_17 : f32 to vector<8x32xf32>
    %56 = arith.addf %55, %54 : vector<8x32xf32>
    %57 = arith.divf %55, %56 : vector<8x32xf32>
    %58 = arith.mulf %49, %30 : vector<8x32xf32>
    %59 = arith.mulf %48, %51 : vector<8x32xf32>
    %60 = arith.addf %58, %59 : vector<8x32xf32>
    %61 = math.tanh %60 : vector<8x32xf32>
    %62 = arith.mulf %57, %61 : vector<8x32xf32>
    %63 = arith.index_cast %36 : i32 to index
    %c0_18 = arith.constant 0 : index
    %64 = vector.load %arg6[%63, %c0_18] : memref<64x32xf32, #tpu.memory_space<vmem>>, vector<8x32xf32>
    tpu.vector_store %arg6[%63, %c0_18], %62 {strides = array<i32>} : memref<64x32xf32, #tpu.memory_space<vmem>>, vector<8x32xf32>,
    %c2_i32 = arith.constant 2 : i32
    %c8_i32_19 = arith.constant 8 : i32
    %65 = arith.muli %c2_i32, %c8_i32_19 : i32
    %66 = tpu.assume_multiple %65, 8 : i32
    %c0_20 = arith.constant 0 : index
    %67 = arith.index_cast %66 : i32 to index
    %c0_21 = arith.constant 0 : index
    %68 = vector.load %arg1[%c0_20, %67, %c0_21] : memref<1x64x128xf32, #tpu.memory_space<vmem>>, vector<1x8x128xf32>
    %69 = vector.shape_cast %68 : vector<1x8x128xf32> to vector<8x128xf32>
    %cst_22 = arith.constant dense<0.000000e+00> : vector<8x128xf32>
    %70 = tpu.matmul %62, %0, %cst_22 {dimension_numbers = #tpu.dot_dimension_numbers<[1], [0], [0], [1], [0, 0, 1, 1], [], []>} : vector<8x32xf32>, vector<32x128xf32>, vector<8x128xf32> -> vector<8x128xf32>
    %71 = arith.addf %69, %70 : vector<8x128xf32>
    %72 = vector.extract_strided_slice %71 {offsets = [0, 0], sizes = [8, 64], strides = [1, 1]} : vector<8x128xf32> to vector<8x64xf32>
    %73 = arith.negf %72 : vector<8x64xf32>
    %74 = math.exp %73 : vector<8x64xf32>
    %cst_23 = arith.constant 1.000000e+00 : f32
    %75 = vector.broadcast %cst_23 : f32 to vector<8x64xf32>
    %76 = arith.addf %75, %74 : vector<8x64xf32>
    %77 = arith.divf %75, %76 : vector<8x64xf32>
    %78 = vector.extract_strided_slice %77 {offsets = [0, 0], sizes = [8, 32], strides = [1, 1]} : vector<8x64xf32> to vector<8x32xf32>
    %79 = vector.extract_strided_slice %77 {offsets = [0, 32], sizes = [8, 32], strides = [1, 1]} : vector<8x64xf32> to vector<8x32xf32>
    %80 = vector.extract_strided_slice %71 {offsets = [0, 64], sizes = [8, 32], strides = [1, 1]} : vector<8x128xf32> to vector<8x32xf32>
    %81 = math.tanh %80 : vector<8x32xf32>
    %82 = vector.extract_strided_slice %71 {offsets = [0, 96], sizes = [8, 32], strides = [1, 1]} : vector<8x128xf32> to vector<8x32xf32>
    %83 = arith.negf %82 : vector<8x32xf32>
    %84 = math.exp %83 : vector<8x32xf32>
    %cst_24 = arith.constant 1.000000e+00 : f32
    %85 = vector.broadcast %cst_24 : f32 to vector<8x32xf32>
    %86 = arith.addf %85, %84 : vector<8x32xf32>
    %87 = arith.divf %85, %86 : vector<8x32xf32>
    %88 = arith.mulf %79, %60 : vector<8x32xf32>
    %89 = arith.mulf %78, %81 : vector<8x32xf32>
    %90 = arith.addf %88, %89 : vector<8x32xf32>
    %91 = math.tanh %90 : vector<8x32xf32>
    %92 = arith.mulf %87, %91 : vector<8x32xf32>
    %93 = arith.index_cast %66 : i32 to index
    %c0_25 = arith.constant 0 : index
    %94 = vector.load %arg6[%93, %c0_25] : memref<64x32xf32, #tpu.memory_space<vmem>>, vector<8x32xf32>
    tpu.vector_store %arg6[%93, %c0_25], %92 {strides = array<i32>} : memref<64x32xf32, #tpu.memory_space<vmem>>, vector<8x32xf32>,
    %c3_i32 = arith.constant 3 : i32
    %c8_i32_26 = arith.constant 8 : i32
    %95 = arith.muli %c3_i32, %c8_i32_26 : i32
    %96 = tpu.assume_multiple %95, 8 : i32
    %c0_27 = arith.constant 0 : index
    %97 = arith.index_cast %96 : i32 to index
    %c0_28 = arith.constant 0 : index
    %98 = vector.load %arg1[%c0_27, %97, %c0_28] : memref<1x64x128xf32, #tpu.memory_space<vmem>>, vector<1x8x128xf32>
    %99 = vector.shape_cast %98 : vector<1x8x128xf32> to vector<8x128xf32>
    %cst_29 = arith.constant dense<0.000000e+00> : vector<8x128xf32>
    %100 = tpu.matmul %92, %0, %cst_29 {dimension_numbers = #tpu.dot_dimension_numbers<[1], [0], [0], [1], [0, 0, 1, 1], [], []>} : vector<8x32xf32>, vector<32x128xf32>, vector<8x128xf32> -> vector<8x128xf32>
    %101 = arith.addf %99, %100 : vector<8x128xf32>
    %102 = vector.extract_strided_slice %101 {offsets = [0, 0], sizes = [8, 64], strides = [1, 1]} : vector<8x128xf32> to vector<8x64xf32>
    %103 = arith.negf %102 : vector<8x64xf32>
    %104 = math.exp %103 : vector<8x64xf32>
    %cst_30 = arith.constant 1.000000e+00 : f32
    %105 = vector.broadcast %cst_30 : f32 to vector<8x64xf32>
    %106 = arith.addf %105, %104 : vector<8x64xf32>
    %107 = arith.divf %105, %106 : vector<8x64xf32>
    %108 = vector.extract_strided_slice %107 {offsets = [0, 0], sizes = [8, 32], strides = [1, 1]} : vector<8x64xf32> to vector<8x32xf32>
    %109 = vector.extract_strided_slice %107 {offsets = [0, 32], sizes = [8, 32], strides = [1, 1]} : vector<8x64xf32> to vector<8x32xf32>
    %110 = vector.extract_strided_slice %101 {offsets = [0, 64], sizes = [8, 32], strides = [1, 1]} : vector<8x128xf32> to vector<8x32xf32>
    %111 = math.tanh %110 : vector<8x32xf32>
    %112 = vector.extract_strided_slice %101 {offsets = [0, 96], sizes = [8, 32], strides = [1, 1]} : vector<8x128xf32> to vector<8x32xf32>
    %113 = arith.negf %112 : vector<8x32xf32>
    %114 = math.exp %113 : vector<8x32xf32>
    %cst_31 = arith.constant 1.000000e+00 : f32
    %115 = vector.broadcast %cst_31 : f32 to vector<8x32xf32>
    %116 = arith.addf %115, %114 : vector<8x32xf32>
    %117 = arith.divf %115, %116 : vector<8x32xf32>
    %118 = arith.mulf %109, %90 : vector<8x32xf32>
    %119 = arith.mulf %108, %111 : vector<8x32xf32>
    %120 = arith.addf %118, %119 : vector<8x32xf32>
    %121 = math.tanh %120 : vector<8x32xf32>
    %122 = arith.mulf %117, %121 : vector<8x32xf32>
    %123 = arith.index_cast %96 : i32 to index
    %c0_32 = arith.constant 0 : index
    %124 = vector.load %arg6[%123, %c0_32] : memref<64x32xf32, #tpu.memory_space<vmem>>, vector<8x32xf32>
    tpu.vector_store %arg6[%123, %c0_32], %122 {strides = array<i32>} : memref<64x32xf32, #tpu.memory_space<vmem>>, vector<8x32xf32>,
    %c4_i32 = arith.constant 4 : i32
    %c8_i32_33 = arith.constant 8 : i32
    %125 = arith.muli %c4_i32, %c8_i32_33 : i32
    %126 = tpu.assume_multiple %125, 8 : i32
    %c0_34 = arith.constant 0 : index
    %127 = arith.index_cast %126 : i32 to index
    %c0_35 = arith.constant 0 : index
    %128 = vector.load %arg1[%c0_34, %127, %c0_35] : memref<1x64x128xf32, #tpu.memory_space<vmem>>, vector<1x8x128xf32>
    %129 = vector.shape_cast %128 : vector<1x8x128xf32> to vector<8x128xf32>
    %cst_36 = arith.constant dense<0.000000e+00> : vector<8x128xf32>
    %130 = tpu.matmul %122, %0, %cst_36 {dimension_numbers = #tpu.dot_dimension_numbers<[1], [0], [0], [1], [0, 0, 1, 1], [], []>} : vector<8x32xf32>, vector<32x128xf32>, vector<8x128xf32> -> vector<8x128xf32>
    %131 = arith.addf %129, %130 : vector<8x128xf32>
    %132 = vector.extract_strided_slice %131 {offsets = [0, 0], sizes = [8, 64], strides = [1, 1]} : vector<8x128xf32> to vector<8x64xf32>
    %133 = arith.negf %132 : vector<8x64xf32>
    %134 = math.exp %133 : vector<8x64xf32>
    %cst_37 = arith.constant 1.000000e+00 : f32
    %135 = vector.broadcast %cst_37 : f32 to vector<8x64xf32>
    %136 = arith.addf %135, %134 : vector<8x64xf32>
    %137 = arith.divf %135, %136 : vector<8x64xf32>
    %138 = vector.extract_strided_slice %137 {offsets = [0, 0], sizes = [8, 32], strides = [1, 1]} : vector<8x64xf32> to vector<8x32xf32>
    %139 = vector.extract_strided_slice %137 {offsets = [0, 32], sizes = [8, 32], strides = [1, 1]} : vector<8x64xf32> to vector<8x32xf32>
    %140 = vector.extract_strided_slice %131 {offsets = [0, 64], sizes = [8, 32], strides = [1, 1]} : vector<8x128xf32> to vector<8x32xf32>
    %141 = math.tanh %140 : vector<8x32xf32>
    %142 = vector.extract_strided_slice %131 {offsets = [0, 96], sizes = [8, 32], strides = [1, 1]} : vector<8x128xf32> to vector<8x32xf32>
    %143 = arith.negf %142 : vector<8x32xf32>
    %144 = math.exp %143 : vector<8x32xf32>
    %cst_38 = arith.constant 1.000000e+00 : f32
    %145 = vector.broadcast %cst_38 : f32 to vector<8x32xf32>
    %146 = arith.addf %145, %144 : vector<8x32xf32>
    %147 = arith.divf %145, %146 : vector<8x32xf32>
    %148 = arith.mulf %139, %120 : vector<8x32xf32>
    %149 = arith.mulf %138, %141 : vector<8x32xf32>
    %150 = arith.addf %148, %149 : vector<8x32xf32>
    %151 = math.tanh %150 : vector<8x32xf32>
    %152 = arith.mulf %147, %151 : vector<8x32xf32>
    %153 = arith.index_cast %126 : i32 to index
    %c0_39 = arith.constant 0 : index
    %154 = vector.load %arg6[%153, %c0_39] : memref<64x32xf32, #tpu.memory_space<vmem>>, vector<8x32xf32>
    tpu.vector_store %arg6[%153, %c0_39], %152 {strides = array<i32>} : memref<64x32xf32, #tpu.memory_space<vmem>>, vector<8x32xf32>,
    %c5_i32 = arith.constant 5 : i32
    %c8_i32_40 = arith.constant 8 : i32
    %155 = arith.muli %c5_i32, %c8_i32_40 : i32
    %156 = tpu.assume_multiple %155, 8 : i32
    %c0_41 = arith.constant 0 : index
    %157 = arith.index_cast %156 : i32 to index
    %c0_42 = arith.constant 0 : index
    %158 = vector.load %arg1[%c0_41, %157, %c0_42] : memref<1x64x128xf32, #tpu.memory_space<vmem>>, vector<1x8x128xf32>
    %159 = vector.shape_cast %158 : vector<1x8x128xf32> to vector<8x128xf32>
    %cst_43 = arith.constant dense<0.000000e+00> : vector<8x128xf32>
    %160 = tpu.matmul %152, %0, %cst_43 {dimension_numbers = #tpu.dot_dimension_numbers<[1], [0], [0], [1], [0, 0, 1, 1], [], []>} : vector<8x32xf32>, vector<32x128xf32>, vector<8x128xf32> -> vector<8x128xf32>
    %161 = arith.addf %159, %160 : vector<8x128xf32>
    %162 = vector.extract_strided_slice %161 {offsets = [0, 0], sizes = [8, 64], strides = [1, 1]} : vector<8x128xf32> to vector<8x64xf32>
    %163 = arith.negf %162 : vector<8x64xf32>
    %164 = math.exp %163 : vector<8x64xf32>
    %cst_44 = arith.constant 1.000000e+00 : f32
    %165 = vector.broadcast %cst_44 : f32 to vector<8x64xf32>
    %166 = arith.addf %165, %164 : vector<8x64xf32>
    %167 = arith.divf %165, %166 : vector<8x64xf32>
    %168 = vector.extract_strided_slice %167 {offsets = [0, 0], sizes = [8, 32], strides = [1, 1]} : vector<8x64xf32> to vector<8x32xf32>
    %169 = vector.extract_strided_slice %167 {offsets = [0, 32], sizes = [8, 32], strides = [1, 1]} : vector<8x64xf32> to vector<8x32xf32>
    %170 = vector.extract_strided_slice %161 {offsets = [0, 64], sizes = [8, 32], strides = [1, 1]} : vector<8x128xf32> to vector<8x32xf32>
    %171 = math.tanh %170 : vector<8x32xf32>
    %172 = vector.extract_strided_slice %161 {offsets = [0, 96], sizes = [8, 32], strides = [1, 1]} : vector<8x128xf32> to vector<8x32xf32>
    %173 = arith.negf %172 : vector<8x32xf32>
    %174 = math.exp %173 : vector<8x32xf32>
    %cst_45 = arith.constant 1.000000e+00 : f32
    %175 = vector.broadcast %cst_45 : f32 to vector<8x32xf32>
    %176 = arith.addf %175, %174 : vector<8x32xf32>
    %177 = arith.divf %175, %176 : vector<8x32xf32>
    %178 = arith.mulf %169, %150 : vector<8x32xf32>
    %179 = arith.mulf %168, %171 : vector<8x32xf32>
    %180 = arith.addf %178, %179 : vector<8x32xf32>
    %181 = math.tanh %180 : vector<8x32xf32>
    %182 = arith.mulf %177, %181 : vector<8x32xf32>
    %183 = arith.index_cast %156 : i32 to index
    %c0_46 = arith.constant 0 : index
    %184 = vector.load %arg6[%183, %c0_46] : memref<64x32xf32, #tpu.memory_space<vmem>>, vector<8x32xf32>
    tpu.vector_store %arg6[%183, %c0_46], %182 {strides = array<i32>} : memref<64x32xf32, #tpu.memory_space<vmem>>, vector<8x32xf32>,
    %c6_i32 = arith.constant 6 : i32
    %c8_i32_47 = arith.constant 8 : i32
    %185 = arith.muli %c6_i32, %c8_i32_47 : i32
    %186 = tpu.assume_multiple %185, 8 : i32
    %c0_48 = arith.constant 0 : index
    %187 = arith.index_cast %186 : i32 to index
    %c0_49 = arith.constant 0 : index
    %188 = vector.load %arg1[%c0_48, %187, %c0_49] : memref<1x64x128xf32, #tpu.memory_space<vmem>>, vector<1x8x128xf32>
    %189 = vector.shape_cast %188 : vector<1x8x128xf32> to vector<8x128xf32>
    %cst_50 = arith.constant dense<0.000000e+00> : vector<8x128xf32>
    %190 = tpu.matmul %182, %0, %cst_50 {dimension_numbers = #tpu.dot_dimension_numbers<[1], [0], [0], [1], [0, 0, 1, 1], [], []>} : vector<8x32xf32>, vector<32x128xf32>, vector<8x128xf32> -> vector<8x128xf32>
    %191 = arith.addf %189, %190 : vector<8x128xf32>
    %192 = vector.extract_strided_slice %191 {offsets = [0, 0], sizes = [8, 64], strides = [1, 1]} : vector<8x128xf32> to vector<8x64xf32>
    %193 = arith.negf %192 : vector<8x64xf32>
    %194 = math.exp %193 : vector<8x64xf32>
    %cst_51 = arith.constant 1.000000e+00 : f32
    %195 = vector.broadcast %cst_51 : f32 to vector<8x64xf32>
    %196 = arith.addf %195, %194 : vector<8x64xf32>
    %197 = arith.divf %195, %196 : vector<8x64xf32>
    %198 = vector.extract_strided_slice %197 {offsets = [0, 0], sizes = [8, 32], strides = [1, 1]} : vector<8x64xf32> to vector<8x32xf32>
    %199 = vector.extract_strided_slice %197 {offsets = [0, 32], sizes = [8, 32], strides = [1, 1]} : vector<8x64xf32> to vector<8x32xf32>
    %200 = vector.extract_strided_slice %191 {offsets = [0, 64], sizes = [8, 32], strides = [1, 1]} : vector<8x128xf32> to vector<8x32xf32>
    %201 = math.tanh %200 : vector<8x32xf32>
    %202 = vector.extract_strided_slice %191 {offsets = [0, 96], sizes = [8, 32], strides = [1, 1]} : vector<8x128xf32> to vector<8x32xf32>
    %203 = arith.negf %202 : vector<8x32xf32>
    %204 = math.exp %203 : vector<8x32xf32>
    %cst_52 = arith.constant 1.000000e+00 : f32
    %205 = vector.broadcast %cst_52 : f32 to vector<8x32xf32>
    %206 = arith.addf %205, %204 : vector<8x32xf32>
    %207 = arith.divf %205, %206 : vector<8x32xf32>
    %208 = arith.mulf %199, %180 : vector<8x32xf32>
    %209 = arith.mulf %198, %201 : vector<8x32xf32>
    %210 = arith.addf %208, %209 : vector<8x32xf32>
    %211 = math.tanh %210 : vector<8x32xf32>
    %212 = arith.mulf %207, %211 : vector<8x32xf32>
    %213 = arith.index_cast %186 : i32 to index
    %c0_53 = arith.constant 0 : index
    %214 = vector.load %arg6[%213, %c0_53] : memref<64x32xf32, #tpu.memory_space<vmem>>, vector<8x32xf32>
    tpu.vector_store %arg6[%213, %c0_53], %212 {strides = array<i32>} : memref<64x32xf32, #tpu.memory_space<vmem>>, vector<8x32xf32>,
    %c7_i32 = arith.constant 7 : i32
    %c8_i32_54 = arith.constant 8 : i32
    %215 = arith.muli %c7_i32, %c8_i32_54 : i32
    %216 = tpu.assume_multiple %215, 8 : i32
    %c0_55 = arith.constant 0 : index
    %217 = arith.index_cast %216 : i32 to index
    %c0_56 = arith.constant 0 : index
    %218 = vector.load %arg1[%c0_55, %217, %c0_56] : memref<1x64x128xf32, #tpu.memory_space<vmem>>, vector<1x8x128xf32>
    %219 = vector.shape_cast %218 : vector<1x8x128xf32> to vector<8x128xf32>
    %cst_57 = arith.constant dense<0.000000e+00> : vector<8x128xf32>
    %220 = tpu.matmul %212, %0, %cst_57 {dimension_numbers = #tpu.dot_dimension_numbers<[1], [0], [0], [1], [0, 0, 1, 1], [], []>} : vector<8x32xf32>, vector<32x128xf32>, vector<8x128xf32> -> vector<8x128xf32>
    %221 = arith.addf %219, %220 : vector<8x128xf32>
    %222 = vector.extract_strided_slice %221 {offsets = [0, 0], sizes = [8, 64], strides = [1, 1]} : vector<8x128xf32> to vector<8x64xf32>
    %223 = arith.negf %222 : vector<8x64xf32>
    %224 = math.exp %223 : vector<8x64xf32>
    %cst_58 = arith.constant 1.000000e+00 : f32
    %225 = vector.broadcast %cst_58 : f32 to vector<8x64xf32>
    %226 = arith.addf %225, %224 : vector<8x64xf32>
    %227 = arith.divf %225, %226 : vector<8x64xf32>
    %228 = vector.extract_strided_slice %227 {offsets = [0, 0], sizes = [8, 32], strides = [1, 1]} : vector<8x64xf32> to vector<8x32xf32>
    %229 = vector.extract_strided_slice %227 {offsets = [0, 32], sizes = [8, 32], strides = [1, 1]} : vector<8x64xf32> to vector<8x32xf32>
    %230 = vector.extract_strided_slice %221 {offsets = [0, 64], sizes = [8, 32], strides = [1, 1]} : vector<8x128xf32> to vector<8x32xf32>
    %231 = math.tanh %230 : vector<8x32xf32>
    %232 = vector.extract_strided_slice %221 {offsets = [0, 96], sizes = [8, 32], strides = [1, 1]} : vector<8x128xf32> to vector<8x32xf32>
    %233 = arith.negf %232 : vector<8x32xf32>
    %234 = math.exp %233 : vector<8x32xf32>
    %cst_59 = arith.constant 1.000000e+00 : f32
    %235 = vector.broadcast %cst_59 : f32 to vector<8x32xf32>
    %236 = arith.addf %235, %234 : vector<8x32xf32>
    %237 = arith.divf %235, %236 : vector<8x32xf32>
    %238 = arith.mulf %229, %210 : vector<8x32xf32>
    %239 = arith.mulf %228, %231 : vector<8x32xf32>
    %240 = arith.addf %238, %239 : vector<8x32xf32>
    %241 = math.tanh %240 : vector<8x32xf32>
    %242 = arith.mulf %237, %241 : vector<8x32xf32>
    %243 = arith.index_cast %216 : i32 to index
    %c0_60 = arith.constant 0 : index
    %244 = vector.load %arg6[%243, %c0_60] : memref<64x32xf32, #tpu.memory_space<vmem>>, vector<8x32xf32>
    tpu.vector_store %arg6[%243, %c0_60], %242 {strides = array<i32>} : memref<64x32xf32, #tpu.memory_space<vmem>>, vector<8x32xf32>,
    %c8_i32_61 = arith.constant 8 : i32
    %c0_62 = arith.constant 0 : index
    %c0_63 = arith.constant 0 : index
    %245 = vector.load %arg6[%c0_62, %c0_63] : memref<64x32xf32, #tpu.memory_space<vmem>>, vector<64x32xf32>
    %cst_64 = arith.constant dense<0.000000e+00> : vector<64x1xf32>
    %246 = tpu.matmul %245, %1, %cst_64 {dimension_numbers = #tpu.dot_dimension_numbers<[1], [0], [0], [1], [0, 0, 1, 1], [], []>} : vector<64x32xf32>, vector<32x1xf32>, vector<64x1xf32> -> vector<64x1xf32>
    %247 = vector.broadcast %2 : vector<1x1xf32> to vector<64x1xf32>
    %248 = arith.addf %246, %247 : vector<64x1xf32>
    %c0_65 = arith.constant 0 : index
    %c0_66 = arith.constant 0 : index
    %c0_67 = arith.constant 0 : index
    %249 = vector.load %arg5[%c0_65, %c0_66, %c0_67] : memref<1x64x1xf32, #tpu.memory_space<vmem>>, vector<1x64x1xf32>
    %250 = vector.shape_cast %249 : vector<1x64x1xf32> to vector<64x1xf32>
    %251 = vector.shape_cast %248 : vector<64x1xf32> to vector<1x64x1xf32>
    tpu.vector_store %arg5[%c0_65, %c0_66, %c0_67], %251 {strides = array<i32>} : memref<1x64x1xf32, #tpu.memory_space<vmem>>, vector<1x64x1xf32>,
    return
  }
  func.func @transform_0(%arg0: i32) -> (i32, i32, i32) {
    %c0_i32 = arith.constant 0 : i32
    %c0_i32_0 = arith.constant 0 : i32
    %c0_i32_1 = arith.constant 0 : i32
    return %arg0, %c0_i32, %c0_i32_0 : i32, i32, i32
  }
  func.func @transform_1(%arg0: i32) -> (i32, i32) {
    %c0_i32 = arith.constant 0 : i32
    %c0_i32_0 = arith.constant 0 : i32
    %c0_i32_1 = arith.constant 0 : i32
    return %c0_i32, %c0_i32_0 : i32, i32
  }
  func.func @transform_2(%arg0: i32) -> (i32, i32) {
    %c0_i32 = arith.constant 0 : i32
    %c0_i32_0 = arith.constant 0 : i32
    %c0_i32_1 = arith.constant 0 : i32
    return %c0_i32, %c0_i32_0 : i32, i32
  }
  func.func @transform_3(%arg0: i32) -> (i32, i32) {
    %c0_i32 = arith.constant 0 : i32
    %c0_i32_0 = arith.constant 0 : i32
    %c0_i32_1 = arith.constant 0 : i32
    return %c0_i32, %c0_i32_0 : i32, i32
  }
  func.func @transform_4(%arg0: i32) -> (i32, i32, i32) {
    %c0_i32 = arith.constant 0 : i32
    %c0_i32_0 = arith.constant 0 : i32
    %c0_i32_1 = arith.constant 0 : i32
    return %arg0, %c0_i32, %c0_i32_0 : i32, i32, i32
  }
}

</mosaic_0001>

<llo_original>
// kernel: tpu_custom_call.1
$region0: #{tpu_custom_call.1}
  #allocation0 [shape = 'u32[]', space=smem, size = 0x4, offset = 0x4, fixed_abs, tag = 'smem constant byte address 0x4 - core index']
  #allocation1 [shape = 'u32[144,128]{1,0:T(1,128)}', space=vmem, size = 0x12000, scoped, tag = 'internal scratch']
  #allocation2 [shape = 'f32[64,32]{1,0:T(8,128)}', space=vmem, size = 0x8000, scoped, tag = 'scratch operand']
  #allocation3 [shape = 'f32[1,1]{1,0:T(1,128)S(1)}', space=vmem, size = 0x200, scoped, tag = 'scoped memory for tpu_custom_call.1']
  %s0 = inlined_call_operand.hbm [shape: f32[1,64,128], index: 0, kind: input, shape index: {}]
  %s1 = inlined_call_operand.vmem [shape: f32[32,128], index: 1, kind: input, shape index: {}]
  %s2 = inlined_call_operand.vmem [shape: f32[32,1], index: 2, kind: input, shape index: {}]
  %s3 = inlined_call_operand.<no memory space> [shape: f32[1,1], index: 3, kind: input, shape index: {}]
  %s4 = inlined_call_operand.vmem [shape: f32[1,64,1], index: 4, kind: output, shape index: {}]
  %s5 = sld [smem:[#allocation0]]
  $region30: #{tpu_custom_call.1} parent=0
    _
  %s7 = ssub.s32 1, %s5
  %s8 = scalar_select 0, %s7, %s5
  %v9 = vstv %s3
  %10 = vst [vmem:[#allocation3] sm:$0x1] %v9
  $region1: #{tpu_custom_call.1} parent=0
    #allocation4 [shape = 'u8[32768]{0}', space=vmem, size = 0x8000, scoped, tag = 'input window, operand 0, single buffered']
    #allocation5 [shape = 's32[1]{0}', space=sflag, size = 0x4, scoped, tag = 'scoped memory for tpu_custom_call.1']
    %11 = vsyncpa [#allocation5], 0
    // Predicated region
    $region2: #{tpu_custom_call.1} parent=1 // pred_check
      _
    $region3: #{tpu_custom_call.1} parent=1 // pred_check_branch
      %13 = sbr.rel (0) target = $region5
    $region4: #{tpu_custom_call.1} parent=1 // pred_region
      %s15 = ssub.s32 1024, 1024
      %16 = vsyncadd [#allocation5], %s15
      %s17 = sshll.u32 [#allocation4], 4
      %s18 = int_to_ptr.vmem [resolvable:$true] %s17
      %23 = dma.hbm_to_vmem [thread:$0]  %s0, 1024, %s18, [#allocation5], 128, 128, 8
    $region5: #{tpu_custom_call.1} parent=1 // pred_fallthru
      _
    // Predicated region
    $region6: #{tpu_custom_call.1} parent=1 // pred_check
      _
    $region7: #{tpu_custom_call.1} parent=1 // pred_check_branch
      %25 = sbr.rel (0) target = $region9
    $region8: #{tpu_custom_call.1} parent=1 // pred_region
      _
    $region9: #{tpu_custom_call.1} parent=1 // pred_fallthru
      _
    // Predicated region
    $region10: #{tpu_custom_call.1} parent=1 // pred_check
      _
    $region11: #{tpu_custom_call.1} parent=1 // pred_check_branch
      %27 = sbr.rel (0) target = $region13
    $region12: #{tpu_custom_call.1} parent=1 // pred_region
      _
    $region13: #{tpu_custom_call.1} parent=1 // pred_fallthru
      _
    // Predicated region
    $region14: #{tpu_custom_call.1} parent=1 // pred_check
      _
    $region15: #{tpu_custom_call.1} parent=1 // pred_check_branch
      %29 = sbr.rel (0) target = $region17
    $region16: #{tpu_custom_call.1} parent=1 // pred_region
      _
    $region17: #{tpu_custom_call.1} parent=1 // pred_fallthru
      _
    // Predicated region
    $region18: #{tpu_custom_call.1} parent=1 // pred_check
      _
    $region19: #{tpu_custom_call.1} parent=1 // pred_check_branch
      %31 = sbr.rel (0) target = $region21
    $region20: #{tpu_custom_call.1} parent=1 // pred_region
      %32 = dma.done [#allocation5], 1024
    $region21: #{tpu_custom_call.1} parent=1 // pred_fallthru
      _
    %v33 = vld [vmem:[%s1] sm:$0xff]
    %v34 = vld [vmem:[%s1 + $0x8] sm:$0xff]
    %v35 = vld [vmem:[%s1 + $0x10] sm:$0xff]
    %v36 = vld [vmem:[%s1 + $0x18] sm:$0xff]
    %v37 = vld [vmem:[%s2] sm:$0xff]
    %v38 = vld [vmem:[%s2 + $0x8] sm:$0xff]
    %v39 = vld [vmem:[%s2 + $0x10] sm:$0xff]
    %v40 = vld [vmem:[%s2 + $0x18] sm:$0xff]
    %v41 = vld [vmem:[#allocation3] sm:$0x1]
    %v42 = vld [vmem:[#allocation4] sm:$0xff]
    %vm43 = vcmask 261120
    %v45 = vsel %vm43, 0.0, 0
    %47 = vmatprep.subr.mxu0 0.0
    %48 = vmatpush1.msra.mxu0 0.0
    %49 = vmatprep.subr.mxu0 0.0
    %50 = vmatpush1.msra.mxu0 0.0
    %51 = vmatprep.subr.mxu0 0.0
    %52 = vmatpush1.msra.mxu0 0.0
    %53 = vmatprep.subr.mxu0 0.0
    %54 = vmatpush1.msra.mxu0 0.0
    %55 = vmatprep.subr.mxu0 0.0
    %56 = vmatpush1.msra.mxu0 0.0
    %57 = vmatprep.subr.mxu0 0.0
    %58 = vmatpush1.msra.mxu0 0.0
    %59 = vmatprep.subr.mxu0 0.0
    %60 = vmatpush1.msra.mxu0 0.0
    %61 = vmatprep.subr.mxu0 0.0
    %62 = vmatpush1.msra.mxu0 0.0
    %63 = vmatprep.subr.mxu0 0.0
    %64 = vmatpush1.msra.mxu0 0.0
    %65 = vmatprep.subr.mxu0 0.0
    %66 = vmatpush1.msra.mxu0 0.0
    %67 = vmatprep.subr.mxu0 0.0
    %68 = vmatpush1.msra.mxu0 0.0
    %69 = vmatprep.subr.mxu0 0.0
    %70 = vmatpush1.msra.mxu0 0.0
    %71 = vmatprep.subr.mxu0 0.0
    %72 = vmatpush1.msra.mxu0 %v36
    %73 = vmatprep.subr.mxu0 0.0
    %74 = vmatpush1.msra.mxu0 %v35
    %75 = vmatprep.subr.mxu0 0.0
    %76 = vmatpush1.msra.mxu0 %v34
    %77 = vmatprep.subr.mxu0 0.0
    %78 = vmatpush1.msra.mxu0 %v33
    %79 = vmatprep.subr.mxu0 0.0
    %80 = vmatpush2.msra.mxu0 0.0
    %81 = vmatprep.subr.mxu0 0.0
    %82 = vmatpush2.msra.mxu0 0.0
    %83 = vmatprep.subr.mxu0 0.0
    %84 = vmatpush2.msra.mxu0 0.0
    %85 = vmatprep.subr.mxu0 0.0
    %86 = vmatpush2.msra.mxu0 0.0
    %87 = vmatprep.subr.mxu0 0.0
    %88 = vmatpush2.msra.mxu0 0.0
    %89 = vmatprep.subr.mxu0 0.0
    %90 = vmatpush2.msra.mxu0 0.0
    %91 = vmatprep.subr.mxu0 0.0
    %92 = vmatpush2.msra.mxu0 0.0
    %93 = vmatprep.subr.mxu0 0.0
    %94 = vmatpush2.msra.mxu0 0.0
    %95 = vmatprep.subr.mxu0 0.0
    %96 = vmatpush2.msra.mxu0 0.0
    %97 = vmatprep.subr.mxu0 0.0
    %98 = vmatpush2.msra.mxu0 0.0
    %99 = vmatprep.subr.mxu0 0.0
    %100 = vmatpush2.msra.mxu0 0.0
    %101 = vmatprep.subr.mxu0 0.0
    %102 = vmatpush2.msra.mxu0 0.0
    %103 = vmatprep.subr.mxu0 0.0
    %104 = vmatpush2.msra.mxu0 0.0
    %105 = vmatprep.subr.mxu0 0.0
    %106 = vmatpush2.msra.mxu0 0.0
    %107 = vmatprep.subr.mxu0 0.0
    %108 = vmatpush2.msra.mxu0 0.0
    %109 = vmatprep.subr.mxu0 0.0
    %110 = vmatpush2.msra.mxu0 0.0
    %111 = vmatprep.mubr.f32.mxu0 0.0
    %112 = vmatmul.mubr.f32.gmra.mxu0 %v45
    %v113 = vpop.f32.mrf.mxu0
    %v114 = vadd.f32 0.0, %v113
    %v115 = vpop.f32.mrf.mxu0
    %116 = vdwg.mxu0
    %v117 = vadd.f32 %v42, %v114
    %v118 = vxor.u32 %v117, 2147483648
    %v119 = vmul.f32 %v118, 1.442695
    %v120 = vpow.pop %v119
    %v121 = vadd.f32 %v120, 1.0
    %v122 = vrcp.pop %v121
    %v123 = vmul.f32 1.0, %v122
    %v124 = vtanh.pop %v117
    %v125 = vmul.f32 %v123, 0.0
    %127 = vrot.lane.b32.xlu0 %v124, 64
    %v128 = vpop.permute.xlu0 %127
    %v130 = vmul.f32 %v123, %v128
    %132 = vrot.lane.b32.xlu0 %v130, 32
    %v133 = vpop.permute.xlu0 %132
    %v135 = vadd.f32 %v125, %v133
    %v136 = vtanh.pop %v135
    %138 = vrot.lane.b32.xlu0 %v136, 64
    %v139 = vpop.permute.xlu0 %138
    %v141 = vmul.f32 %v123, %v139
    %143 = vrot.lane.b32.xlu0 %v141, 32
    %v144 = vpop.permute.xlu0 %143
    %146 = vst.msk [vmem:[#allocation2] sm:$0xff] %vm43, %v144
    %s147 = scalar_lea.vmem [#allocation4], 8
    %v148 = vld [vmem:[%s147] sm:$0xff]
    %v149 = vsel %vm43, %v144, 0
    %151 = vmatprep.subr.mxu0 0.0
    %152 = vmatpush1.msra.mxu0 0.0
    %153 = vmatprep.subr.mxu0 0.0
    %154 = vmatpush1.msra.mxu0 0.0
    %155 = vmatprep.subr.mxu0 0.0
    %156 = vmatpush1.msra.mxu0 0.0
    %157 = vmatprep.subr.mxu0 0.0
    %158 = vmatpush1.msra.mxu0 0.0
    %159 = vmatprep.subr.mxu0 0.0
    %160 = vmatpush1.msra.mxu0 0.0
    %161 = vmatprep.subr.mxu0 0.0
    %162 = vmatpush1.msra.mxu0 0.0
    %163 = vmatprep.subr.mxu0 0.0
    %164 = vmatpush1.msra.mxu0 0.0
    %165 = vmatprep.subr.mxu0 0.0
    %166 = vmatpush1.msra.mxu0 0.0
    %167 = vmatprep.subr.mxu0 0.0
    %168 = vmatpush1.msra.mxu0 0.0
    %169 = vmatprep.subr.mxu0 0.0
    %170 = vmatpush1.msra.mxu0 0.0
    %171 = vmatprep.subr.mxu0 0.0
    %172 = vmatpush1.msra.mxu0 0.0
    %173 = vmatprep.subr.mxu0 0.0
    %174 = vmatpush1.msra.mxu0 0.0
    %175 = vmatprep.subr.mxu0 0.0
    %176 = vmatpush1.msra.mxu0 %v36
    %177 = vmatprep.subr.mxu0 0.0
    %178 = vmatpush1.msra.mxu0 %v35
    %179 = vmatprep.subr.mxu0 0.0
    %180 = vmatpush1.msra.mxu0 %v34
    %181 = vmatprep.subr.mxu0 0.0
    %182 = vmatpush1.msra.mxu0 %v33
    %183 = vmatprep.subr.mxu0 0.0
    %184 = vmatpush2.msra.mxu0 0.0
    %185 = vmatprep.subr.mxu0 0.0
    %186 = vmatpush2.msra.mxu0 0.0
    %187 = vmatprep.subr.mxu0 0.0
    %188 = vmatpush2.msra.mxu0 0.0
    %189 = vmatprep.subr.mxu0 0.0
    %190 = vmatpush2.msra.mxu0 0.0
    %191 = vmatprep.subr.mxu0 0.0
    %192 = vmatpush2.msra.mxu0 0.0
    %193 = vmatprep.subr.mxu0 0.0
    %194 = vmatpush2.msra.mxu0 0.0
    %195 = vmatprep.subr.mxu0 0.0
    %196 = vmatpush2.msra.mxu0 0.0
    %197 = vmatprep.subr.mxu0 0.0
    %198 = vmatpush2.msra.mxu0 0.0
    %199 = vmatprep.subr.mxu0 0.0
    %200 = vmatpush2.msra.mxu0 0.0
    %201 = vmatprep.subr.mxu0 0.0
    %202 = vmatpush2.msra.mxu0 0.0
    %203 = vmatprep.subr.mxu0 0.0
    %204 = vmatpush2.msra.mxu0 0.0
    %205 = vmatprep.subr.mxu0 0.0
    %206 = vmatpush2.msra.mxu0 0.0
    %207 = vmatprep.subr.mxu0 0.0
    %208 = vmatpush2.msra.mxu0 0.0
    %209 = vmatprep.subr.mxu0 0.0
    %210 = vmatpush2.msra.mxu0 0.0
    %211 = vmatprep.subr.mxu0 0.0
    %212 = vmatpush2.msra.mxu0 0.0
    %213 = vmatprep.subr.mxu0 0.0
    %214 = vmatpush2.msra.mxu0 0.0
    %215 = vmatprep.mubr.f32.mxu0 0.0
    %216 = vmatmul.mubr.f32.gmra.mxu0 %v149
    %v217 = vpop.f32.mrf.mxu0
    %v218 = vadd.f32 0.0, %v217
    %v219 = vpop.f32.mrf.mxu0
    %220 = vdwg.mxu0
    %v221 = vadd.f32 %v148, %v218
    %v222 = vxor.u32 %v221, 2147483648
    %v223 = vmul.f32 %v222, 1.442695
    %v224 = vpow.pop %v223
    %v225 = vadd.f32 %v224, 1.0
    %v226 = vrcp.pop %v225
    %v227 = vmul.f32 1.0, %v226
    %v228 = vtanh.pop %v221
    %v229 = vmul.f32 %v227, %v135
    %231 = vrot.lane.b32.xlu0 %v228, 64
    %v232 = vpop.permute.xlu0 %231
    %v234 = vmul.f32 %v227, %v232
    %236 = vrot.lane.b32.xlu0 %v234, 32
    %v237 = vpop.permute.xlu0 %236
    %v239 = vadd.f32 %v229, %v237
    %v240 = vtanh.pop %v239
    %242 = vrot.lane.b32.xlu0 %v240, 64
    %v243 = vpop.permute.xlu0 %242
    %v245 = vmul.f32 %v227, %v243
    %247 = vrot.lane.b32.xlu0 %v245, 32
    %v248 = vpop.permute.xlu0 %247
    %s250 = scalar_lea.vmem [#allocation2], 8
    %251 = vst.msk [vmem:[%s250] sm:$0xff] %vm43, %v248
    %s252 = scalar_lea.vmem [#allocation4], 16
    %v253 = vld [vmem:[%s252] sm:$0xff]
    %v254 = vsel %vm43, %v248, 0
    %256 = vmatprep.subr.mxu0 0.0
    %257 = vmatpush1.msra.mxu0 0.0
    %258 = vmatprep.subr.mxu0 0.0
    %259 = vmatpush1.msra.mxu0 0.0
    %260 = vmatprep.subr.mxu0 0.0
    %261 = vmatpush1.msra.mxu0 0.0
    %262 = vmatprep.subr.mxu0 0.0
    %263 = vmatpush1.msra.mxu0 0.0
    %264 = vmatprep.subr.mxu0 0.0
    %265 = vmatpush1.msra.mxu0 0.0
    %266 = vmatprep.subr.mxu0 0.0
    %267 = vmatpush1.msra.mxu0 0.0
    %268 = vmatprep.subr.mxu0 0.0
    %269 = vmatpush1.msra.mxu0 0.0
    %270 = vmatprep.subr.mxu0 0.0
    %271 = vmatpush1.msra.mxu0 0.0
    %272 = vmatprep.subr.mxu0 0.0
    %273 = vmatpush1.msra.mxu0 0.0
    %274 = vmatprep.subr.mxu0 0.0
    %275 = vmatpush1.msra.mxu0 0.0
    %276 = vmatprep.subr.mxu0 0.0
    %277 = vmatpush1.msra.mxu0 0.0
    %278 = vmatprep.subr.mxu0 0.0
    %279 = vmatpush1.msra.mxu0 0.0
    %280 = vmatprep.subr.mxu0 0.0
    %281 = vmatpush1.msra.mxu0 %v36
    %282 = vmatprep.subr.mxu0 0.0
    %283 = vmatpush1.msra.mxu0 %v35
    %284 = vmatprep.subr.mxu0 0.0
    %285 = vmatpush1.msra.mxu0 %v34
    %286 = vmatprep.subr.mxu0 0.0
    %287 = vmatpush1.msra.mxu0 %v33
    %288 = vmatprep.subr.mxu0 0.0
    %289 = vmatpush2.msra.mxu0 0.0
    %290 = vmatprep.subr.mxu0 0.0
    %291 = vmatpush2.msra.mxu0 0.0
    %292 = vmatprep.subr.mxu0 0.0
    %293 = vmatpush2.msra.mxu0 0.0
    %294 = vmatprep.subr.mxu0 0.0
    %295 = vmatpush2.msra.mxu0 0.0
    %296 = vmatprep.subr.mxu0 0.0
    %297 = vmatpush2.msra.mxu0 0.0
    %298 = vmatprep.subr.mxu0 0.0
    %299 = vmatpush2.msra.mxu0 0.0
    %300 = vmatprep.subr.mxu0 0.0
    %301 = vmatpush2.msra.mxu0 0.0
    %302 = vmatprep.subr.mxu0 0.0
    %303 = vmatpush2.msra.mxu0 0.0
    %304 = vmatprep.subr.mxu0 0.0
    %305 = vmatpush2.msra.mxu0 0.0
    %306 = vmatprep.subr.mxu0 0.0
    %307 = vmatpush2.msra.mxu0 0.0
    %308 = vmatprep.subr.mxu0 0.0
    %309 = vmatpush2.msra.mxu0 0.0
    %310 = vmatprep.subr.mxu0 0.0
    %311 = vmatpush2.msra.mxu0 0.0
    %312 = vmatprep.subr.mxu0 0.0
    %313 = vmatpush2.msra.mxu0 0.0
    %314 = vmatprep.subr.mxu0 0.0
    %315 = vmatpush2.msra.mxu0 0.0
    %316 = vmatprep.subr.mxu0 0.0
    %317 = vmatpush2.msra.mxu0 0.0
    %318 = vmatprep.subr.mxu0 0.0
    %319 = vmatpush2.msra.mxu0 0.0
    %320 = vmatprep.mubr.f32.mxu0 0.0
    %321 = vmatmul.mubr.f32.gmra.mxu0 %v254
    %v322 = vpop.f32.mrf.mxu0
    %v323 = vadd.f32 0.0, %v322
    %v324 = vpop.f32.mrf.mxu0
    %325 = vdwg.mxu0
    %v326 = vadd.f32 %v253, %v323
    %v327 = vxor.u32 %v326, 2147483648
    %v328 = vmul.f32 %v327, 1.442695
    %v329 = vpow.pop %v328
    %v330 = vadd.f32 %v329, 1.0
    %v331 = vrcp.pop %v330
    %v332 = vmul.f32 1.0, %v331
    %v333 = vtanh.pop %v326
    %v334 = vmul.f32 %v332, %v239
    %336 = vrot.lane.b32.xlu0 %v333, 64
    %v337 = vpop.permute.xlu0 %336
    %v339 = vmul.f32 %v332, %v337
    %341 = vrot.lane.b32.xlu0 %v339, 32
    %v342 = vpop.permute.xlu0 %341
    %v344 = vadd.f32 %v334, %v342
    %v345 = vtanh.pop %v344
    %347 = vrot.lane.b32.xlu0 %v345, 64
    %v348 = vpop.permute.xlu0 %347
    %v350 = vmul.f32 %v332, %v348
    %352 = vrot.lane.b32.xlu0 %v350, 32
    %v353 = vpop.permute.xlu0 %352
    %s355 = scalar_lea.vmem [#allocation2], 16
    %356 = vst.msk [vmem:[%s355] sm:$0xff] %vm43, %v353
    %s357 = scalar_lea.vmem [#allocation4], 24
    %v358 = vld [vmem:[%s357] sm:$0xff]
    %v359 = vsel %vm43, %v353, 0
    %361 = vmatprep.subr.mxu0 0.0
    %362 = vmatpush1.msra.mxu0 0.0
    %363 = vmatprep.subr.mxu0 0.0
    %364 = vmatpush1.msra.mxu0 0.0
    %365 = vmatprep.subr.mxu0 0.0
    %366 = vmatpush1.msra.mxu0 0.0
    %367 = vmatprep.subr.mxu0 0.0
    %368 = vmatpush1.msra.mxu0 0.0
    %369 = vmatprep.subr.mxu0 0.0
    %370 = vmatpush1.msra.mxu0 0.0
    %371 = vmatprep.subr.mxu0 0.0
    %372 = vmatpush1.msra.mxu0 0.0
    %373 = vmatprep.subr.mxu0 0.0
    %374 = vmatpush1.msra.mxu0 0.0
    %375 = vmatprep.subr.mxu0 0.0
    %376 = vmatpush1.msra.mxu0 0.0
    %377 = vmatprep.subr.mxu0 0.0
    %378 = vmatpush1.msra.mxu0 0.0
    %379 = vmatprep.subr.mxu0 0.0
    %380 = vmatpush1.msra.mxu0 0.0
    %381 = vmatprep.subr.mxu0 0.0
    %382 = vmatpush1.msra.mxu0 0.0
    %383 = vmatprep.subr.mxu0 0.0
    %384 = vmatpush1.msra.mxu0 0.0
    %385 = vmatprep.subr.mxu0 0.0
    %386 = vmatpush1.msra.mxu0 %v36
    %387 = vmatprep.subr.mxu0 0.0
    %388 = vmatpush1.msra.mxu0 %v35
    %389 = vmatprep.subr.mxu0 0.0
    %390 = vmatpush1.msra.mxu0 %v34
    %391 = vmatprep.subr.mxu0 0.0
    %392 = vmatpush1.msra.mxu0 %v33
    %393 = vmatprep.subr.mxu0 0.0
    %394 = vmatpush2.msra.mxu0 0.0
    %395 = vmatprep.subr.mxu0 0.0
    %396 = vmatpush2.msra.mxu0 0.0
    %397 = vmatprep.subr.mxu0 0.0
    %398 = vmatpush2.msra.mxu0 0.0
    %399 = vmatprep.subr.mxu0 0.0
    %400 = vmatpush2.msra.mxu0 0.0
    %401 = vmatprep.subr.mxu0 0.0
    %402 = vmatpush2.msra.mxu0 0.0
    %403 = vmatprep.subr.mxu0 0.0
    %404 = vmatpush2.msra.mxu0 0.0
    %405 = vmatprep.subr.mxu0 0.0
    %406 = vmatpush2.msra.mxu0 0.0
    %407 = vmatprep.subr.mxu0 0.0
    %408 = vmatpush2.msra.mxu0 0.0
    %409 = vmatprep.subr.mxu0 0.0
    %410 = vmatpush2.msra.mxu0 0.0
    %411 = vmatprep.subr.mxu0 0.0
    %412 = vmatpush2.msra.mxu0 0.0
    %413 = vmatprep.subr.mxu0 0.0
    %414 = vmatpush2.msra.mxu0 0.0
    %415 = vmatprep.subr.mxu0 0.0
    %416 = vmatpush2.msra.mxu0 0.0
    %417 = vmatprep.subr.mxu0 0.0
    %418 = vmatpush2.msra.mxu0 0.0
    %419 = vmatprep.subr.mxu0 0.0
    %420 = vmatpush2.msra.mxu0 0.0
    %421 = vmatprep.subr.mxu0 0.0
    %422 = vmatpush2.msra.mxu0 0.0
    %423 = vmatprep.subr.mxu0 0.0
    %424 = vmatpush2.msra.mxu0 0.0
    %425 = vmatprep.mubr.f32.mxu0 0.0
    %426 = vmatmul.mubr.f32.gmra.mxu0 %v359
    %v427 = vpop.f32.mrf.mxu0
    %v428 = vadd.f32 0.0, %v427
    %v429 = vpop.f32.mrf.mxu0
    %430 = vdwg.mxu0
    %v431 = vadd.f32 %v358, %v428
    %v432 = vxor.u32 %v431, 2147483648
    %v433 = vmul.f32 %v432, 1.442695
    %v434 = vpow.pop %v433
    %v435 = vadd.f32 %v434, 1.0
    %v436 = vrcp.pop %v435
    %v437 = vmul.f32 1.0, %v436
    %v438 = vtanh.pop %v431
    %v439 = vmul.f32 %v437, %v344
    %441 = vrot.lane.b32.xlu0 %v438, 64
    %v442 = vpop.permute.xlu0 %441
    %v444 = vmul.f32 %v437, %v442
    %446 = vrot.lane.b32.xlu0 %v444, 32
    %v447 = vpop.permute.xlu0 %446
    %v449 = vadd.f32 %v439, %v447
    %v450 = vtanh.pop %v449
    %452 = vrot.lane.b32.xlu0 %v450, 64
    %v453 = vpop.permute.xlu0 %452
    %v455 = vmul.f32 %v437, %v453
    %457 = vrot.lane.b32.xlu0 %v455, 32
    %v458 = vpop.permute.xlu0 %457
    %s460 = scalar_lea.vmem [#allocation2], 24
    %461 = vst.msk [vmem:[%s460] sm:$0xff] %vm43, %v458
    %s462 = scalar_lea.vmem [#allocation4], 32
    %v463 = vld [vmem:[%s462] sm:$0xff]
    %v464 = vsel %vm43, %v458, 0
    %466 = vmatprep.subr.mxu0 0.0
    %467 = vmatpush1.msra.mxu0 0.0
    %468 = vmatprep.subr.mxu0 0.0
    %469 = vmatpush1.msra.mxu0 0.0
    %470 = vmatprep.subr.mxu0 0.0
    %471 = vmatpush1.msra.mxu0 0.0
    %472 = vmatprep.subr.mxu0 0.0
    %473 = vmatpush1.msra.mxu0 0.0
    %474 = vmatprep.subr.mxu0 0.0
    %475 = vmatpush1.msra.mxu0 0.0
    %476 = vmatprep.subr.mxu0 0.0
    %477 = vmatpush1.msra.mxu0 0.0
    %478 = vmatprep.subr.mxu0 0.0
    %479 = vmatpush1.msra.mxu0 0.0
    %480 = vmatprep.subr.mxu0 0.0
    %481 = vmatpush1.msra.mxu0 0.0
    %482 = vmatprep.subr.mxu0 0.0
    %483 = vmatpush1.msra.mxu0 0.0
    %484 = vmatprep.subr.mxu0 0.0
    %485 = vmatpush1.msra.mxu0 0.0
    %486 = vmatprep.subr.mxu0 0.0
    %487 = vmatpush1.msra.mxu0 0.0
    %488 = vmatprep.subr.mxu0 0.0
    %489 = vmatpush1.msra.mxu0 0.0
    %490 = vmatprep.subr.mxu0 0.0
    %491 = vmatpush1.msra.mxu0 %v36
    %492 = vmatprep.subr.mxu0 0.0
    %493 = vmatpush1.msra.mxu0 %v35
    %494 = vmatprep.subr.mxu0 0.0
    %495 = vmatpush1.msra.mxu0 %v34
    %496 = vmatprep.subr.mxu0 0.0
    %497 = vmatpush1.msra.mxu0 %v33
    %498 = vmatprep.subr.mxu0 0.0
    %499 = vmatpush2.msra.mxu0 0.0
    %500 = vmatprep.subr.mxu0 0.0
    %501 = vmatpush2.msra.mxu0 0.0
    %502 = vmatprep.subr.mxu0 0.0
    %503 = vmatpush2.msra.mxu0 0.0
    %504 = vmatprep.subr.mxu0 0.0
    %505 = vmatpush2.msra.mxu0 0.0
    %506 = vmatprep.subr.mxu0 0.0
    %507 = vmatpush2.msra.mxu0 0.0
    %508 = vmatprep.subr.mxu0 0.0
    %509 = vmatpush2.msra.mxu0 0.0
    %510 = vmatprep.subr.mxu0 0.0
    %511 = vmatpush2.msra.mxu0 0.0
    %512 = vmatprep.subr.mxu0 0.0
    %513 = vmatpush2.msra.mxu0 0.0
    %514 = vmatprep.subr.mxu0 0.0
    %515 = vmatpush2.msra.mxu0 0.0
    %516 = vmatprep.subr.mxu0 0.0
    %517 = vmatpush2.msra.mxu0 0.0
    %518 = vmatprep.subr.mxu0 0.0
    %519 = vmatpush2.msra.mxu0 0.0
    %520 = vmatprep.subr.mxu0 0.0
    %521 = vmatpush2.msra.mxu0 0.0
    %522 = vmatprep.subr.mxu0 0.0
    %523 = vmatpush2.msra.mxu0 0.0
    %524 = vmatprep.subr.mxu0 0.0
    %525 = vmatpush2.msra.mxu0 0.0
    %526 = vmatprep.subr.mxu0 0.0
    %527 = vmatpush2.msra.mxu0 0.0
    %528 = vmatprep.subr.mxu0 0.0
    %529 = vmatpush2.msra.mxu0 0.0
    %530 = vmatprep.mubr.f32.mxu0 0.0
    %531 = vmatmul.mubr.f32.gmra.mxu0 %v464
    %v532 = vpop.f32.mrf.mxu0
    %v533 = vadd.f32 0.0, %v532
    %v534 = vpop.f32.mrf.mxu0
    %535 = vdwg.mxu0
    %v536 = vadd.f32 %v463, %v533
    %v537 = vxor.u32 %v536, 2147483648
    %v538 = vmul.f32 %v537, 1.442695
    %v539 = vpow.pop %v538
    %v540 = vadd.f32 %v539, 1.0
    %v541 = vrcp.pop %v540
    %v542 = vmul.f32 1.0, %v541
    %v543 = vtanh.pop %v536
    %v544 = vmul.f32 %v542, %v449
    %546 = vrot.lane.b32.xlu0 %v543, 64
    %v547 = vpop.permute.xlu0 %546
    %v549 = vmul.f32 %v542, %v547
    %551 = vrot.lane.b32.xlu0 %v549, 32
    %v552 = vpop.permute.xlu0 %551
    %v554 = vadd.f32 %v544, %v552
    %v555 = vtanh.pop %v554
    %557 = vrot.lane.b32.xlu0 %v555, 64
    %v558 = vpop.permute.xlu0 %557
    %v560 = vmul.f32 %v542, %v558
    %562 = vrot.lane.b32.xlu0 %v560, 32
    %v563 = vpop.permute.xlu0 %562
    %s565 = scalar_lea.vmem [#allocation2], 32
    %566 = vst.msk [vmem:[%s565] sm:$0xff] %vm43, %v563
    %s567 = scalar_lea.vmem [#allocation4], 40
    %v568 = vld [vmem:[%s567] sm:$0xff]
    %v569 = vsel %vm43, %v563, 0
    %571 = vmatprep.subr.mxu0 0.0
    %572 = vmatpush1.msra.mxu0 0.0
    %573 = vmatprep.subr.mxu0 0.0
    %574 = vmatpush1.msra.mxu0 0.0
    %575 = vmatprep.subr.mxu0 0.0
    %576 = vmatpush1.msra.mxu0 0.0
    %577 = vmatprep.subr.mxu0 0.0
    %578 = vmatpush1.msra.mxu0 0.0
    %579 = vmatprep.subr.mxu0 0.0
    %580 = vmatpush1.msra.mxu0 0.0
    %581 = vmatprep.subr.mxu0 0.0
    %582 = vmatpush1.msra.mxu0 0.0
    %583 = vmatprep.subr.mxu0 0.0
    %584 = vmatpush1.msra.mxu0 0.0
    %585 = vmatprep.subr.mxu0 0.0
    %586 = vmatpush1.msra.mxu0 0.0
    %587 = vmatprep.subr.mxu0 0.0
    %588 = vmatpush1.msra.mxu0 0.0
    %589 = vmatprep.subr.mxu0 0.0
    %590 = vmatpush1.msra.mxu0 0.0
    %591 = vmatprep.subr.mxu0 0.0
    %592 = vmatpush1.msra.mxu0 0.0
    %593 = vmatprep.subr.mxu0 0.0
    %594 = vmatpush1.msra.mxu0 0.0
    %595 = vmatprep.subr.mxu0 0.0
    %596 = vmatpush1.msra.mxu0 %v36
    %597 = vmatprep.subr.mxu0 0.0
    %598 = vmatpush1.msra.mxu0 %v35
    %599 = vmatprep.subr.mxu0 0.0
    %600 = vmatpush1.msra.mxu0 %v34
    %601 = vmatprep.subr.mxu0 0.0
    %602 = vmatpush1.msra.mxu0 %v33
    %603 = vmatprep.subr.mxu0 0.0
    %604 = vmatpush2.msra.mxu0 0.0
    %605 = vmatprep.subr.mxu0 0.0
    %606 = vmatpush2.msra.mxu0 0.0
    %607 = vmatprep.subr.mxu0 0.0
    %608 = vmatpush2.msra.mxu0 0.0
    %609 = vmatprep.subr.mxu0 0.0
    %610 = vmatpush2.msra.mxu0 0.0
    %611 = vmatprep.subr.mxu0 0.0
    %612 = vmatpush2.msra.mxu0 0.0
    %613 = vmatprep.subr.mxu0 0.0
    %614 = vmatpush2.msra.mxu0 0.0
    %615 = vmatprep.subr.mxu0 0.0
    %616 = vmatpush2.msra.mxu0 0.0
    %617 = vmatprep.subr.mxu0 0.0
    %618 = vmatpush2.msra.mxu0 0.0
    %619 = vmatprep.subr.mxu0 0.0
    %620 = vmatpush2.msra.mxu0 0.0
    %621 = vmatprep.subr.mxu0 0.0
    %622 = vmatpush2.msra.mxu0 0.0
    %623 = vmatprep.subr.mxu0 0.0
    %624 = vmatpush2.msra.mxu0 0.0
    %625 = vmatprep.subr.mxu0 0.0
    %626 = vmatpush2.msra.mxu0 0.0
    %627 = vmatprep.subr.mxu0 0.0
    %628 = vmatpush2.msra.mxu0 0.0
    %629 = vmatprep.subr.mxu0 0.0
    %630 = vmatpush2.msra.mxu0 0.0
    %631 = vmatprep.subr.mxu0 0.0
    %632 = vmatpush2.msra.mxu0 0.0
    %633 = vmatprep.subr.mxu0 0.0
    %634 = vmatpush2.msra.mxu0 0.0
    %635 = vmatprep.mubr.f32.mxu0 0.0
    %636 = vmatmul.mubr.f32.gmra.mxu0 %v569
    %v637 = vpop.f32.mrf.mxu0
    %v638 = vadd.f32 0.0, %v637
    %v639 = vpop.f32.mrf.mxu0
    %640 = vdwg.mxu0
    %v641 = vadd.f32 %v568, %v638
    %v642 = vxor.u32 %v641, 2147483648
    %v643 = vmul.f32 %v642, 1.442695
    %v644 = vpow.pop %v643
    %v645 = vadd.f32 %v644, 1.0
    %v646 = vrcp.pop %v645
    %v647 = vmul.f32 1.0, %v646
    %v648 = vtanh.pop %v641
    %v649 = vmul.f32 %v647, %v554
    %651 = vrot.lane.b32.xlu0 %v648, 64
    %v652 = vpop.permute.xlu0 %651
    %v654 = vmul.f32 %v647, %v652
    %656 = vrot.lane.b32.xlu0 %v654, 32
    %v657 = vpop.permute.xlu0 %656
    %v659 = vadd.f32 %v649, %v657
    %v660 = vtanh.pop %v659
    %662 = vrot.lane.b32.xlu0 %v660, 64
    %v663 = vpop.permute.xlu0 %662
    %v665 = vmul.f32 %v647, %v663
    %667 = vrot.lane.b32.xlu0 %v665, 32
    %v668 = vpop.permute.xlu0 %667
    %s670 = scalar_lea.vmem [#allocation2], 40
    %671 = vst.msk [vmem:[%s670] sm:$0xff] %vm43, %v668
    %s672 = scalar_lea.vmem [#allocation4], 48
    %v673 = vld [vmem:[%s672] sm:$0xff]
    %v674 = vsel %vm43, %v668, 0
    %676 = vmatprep.subr.mxu0 0.0
    %677 = vmatpush1.msra.mxu0 0.0
    %678 = vmatprep.subr.mxu0 0.0
    %679 = vmatpush1.msra.mxu0 0.0
    %680 = vmatprep.subr.mxu0 0.0
    %681 = vmatpush1.msra.mxu0 0.0
    %682 = vmatprep.subr.mxu0 0.0
    %683 = vmatpush1.msra.mxu0 0.0
    %684 = vmatprep.subr.mxu0 0.0
    %685 = vmatpush1.msra.mxu0 0.0
    %686 = vmatprep.subr.mxu0 0.0
    %687 = vmatpush1.msra.mxu0 0.0
    %688 = vmatprep.subr.mxu0 0.0
    %689 = vmatpush1.msra.mxu0 0.0
    %690 = vmatprep.subr.mxu0 0.0
    %691 = vmatpush1.msra.mxu0 0.0
    %692 = vmatprep.subr.mxu0 0.0
    %693 = vmatpush1.msra.mxu0 0.0
    %694 = vmatprep.subr.mxu0 0.0
    %695 = vmatpush1.msra.mxu0 0.0
    %696 = vmatprep.subr.mxu0 0.0
    %697 = vmatpush1.msra.mxu0 0.0
    %698 = vmatprep.subr.mxu0 0.0
    %699 = vmatpush1.msra.mxu0 0.0
    %700 = vmatprep.subr.mxu0 0.0
    %701 = vmatpush1.msra.mxu0 %v36
    %702 = vmatprep.subr.mxu0 0.0
    %703 = vmatpush1.msra.mxu0 %v35
    %704 = vmatprep.subr.mxu0 0.0
    %705 = vmatpush1.msra.mxu0 %v34
    %706 = vmatprep.subr.mxu0 0.0
    %707 = vmatpush1.msra.mxu0 %v33
    %708 = vmatprep.subr.mxu0 0.0
    %709 = vmatpush2.msra.mxu0 0.0
    %710 = vmatprep.subr.mxu0 0.0
    %711 = vmatpush2.msra.mxu0 0.0
    %712 = vmatprep.subr.mxu0 0.0
    %713 = vmatpush2.msra.mxu0 0.0
    %714 = vmatprep.subr.mxu0 0.0
    %715 = vmatpush2.msra.mxu0 0.0
    %716 = vmatprep.subr.mxu0 0.0
    %717 = vmatpush2.msra.mxu0 0.0
    %718 = vmatprep.subr.mxu0 0.0
    %719 = vmatpush2.msra.mxu0 0.0
    %720 = vmatprep.subr.mxu0 0.0
    %721 = vmatpush2.msra.mxu0 0.0
    %722 = vmatprep.subr.mxu0 0.0
    %723 = vmatpush2.msra.mxu0 0.0
    %724 = vmatprep.subr.mxu0 0.0
    %725 = vmatpush2.msra.mxu0 0.0
    %726 = vmatprep.subr.mxu0 0.0
    %727 = vmatpush2.msra.mxu0 0.0
    %728 = vmatprep.subr.mxu0 0.0
    %729 = vmatpush2.msra.mxu0 0.0
    %730 = vmatprep.subr.mxu0 0.0
    %731 = vmatpush2.msra.mxu0 0.0
    %732 = vmatprep.subr.mxu0 0.0
    %733 = vmatpush2.msra.mxu0 0.0
    %734 = vmatprep.subr.mxu0 0.0
    %735 = vmatpush2.msra.mxu0 0.0
    %736 = vmatprep.subr.mxu0 0.0
    %737 = vmatpush2.msra.mxu0 0.0
    %738 = vmatprep.subr.mxu0 0.0
    %739 = vmatpush2.msra.mxu0 0.0
    %740 = vmatprep.mubr.f32.mxu0 0.0
    %741 = vmatmul.mubr.f32.gmra.mxu0 %v674
    %v742 = vpop.f32.mrf.mxu0
    %v743 = vadd.f32 0.0, %v742
    %v744 = vpop.f32.mrf.mxu0
    %745 = vdwg.mxu0
    %v746 = vadd.f32 %v673, %v743
    %v747 = vxor.u32 %v746, 2147483648
    %v748 = vmul.f32 %v747, 1.442695
    %v749 = vpow.pop %v748
    %v750 = vadd.f32 %v749, 1.0
    %v751 = vrcp.pop %v750
    %v752 = vmul.f32 1.0, %v751
    %v753 = vtanh.pop %v746
    %v754 = vmul.f32 %v752, %v659
    %756 = vrot.lane.b32.xlu0 %v753, 64
    %v757 = vpop.permute.xlu0 %756
    %v759 = vmul.f32 %v752, %v757
    %761 = vrot.lane.b32.xlu0 %v759, 32
    %v762 = vpop.permute.xlu0 %761
    %v764 = vadd.f32 %v754, %v762
    %v765 = vtanh.pop %v764
    %767 = vrot.lane.b32.xlu0 %v765, 64
    %v768 = vpop.permute.xlu0 %767
    %v770 = vmul.f32 %v752, %v768
    %772 = vrot.lane.b32.xlu0 %v770, 32
    %v773 = vpop.permute.xlu0 %772
    %s775 = scalar_lea.vmem [#allocation2], 48
    %776 = vst.msk [vmem:[%s775] sm:$0xff] %vm43, %v773
    %s777 = scalar_lea.vmem [#allocation4], 56
    %v778 = vld [vmem:[%s777] sm:$0xff]
    %v779 = vsel %vm43, %v773, 0
    %781 = vmatprep.subr.mxu0 0.0
    %782 = vmatpush1.msra.mxu0 0.0
    %783 = vmatprep.subr.mxu0 0.0
    %784 = vmatpush1.msra.mxu0 0.0
    %785 = vmatprep.subr.mxu0 0.0
    %786 = vmatpush1.msra.mxu0 0.0
    %787 = vmatprep.subr.mxu0 0.0
    %788 = vmatpush1.msra.mxu0 0.0
    %789 = vmatprep.subr.mxu0 0.0
    %790 = vmatpush1.msra.mxu0 0.0
    %791 = vmatprep.subr.mxu0 0.0
    %792 = vmatpush1.msra.mxu0 0.0
    %793 = vmatprep.subr.mxu0 0.0
    %794 = vmatpush1.msra.mxu0 0.0
    %795 = vmatprep.subr.mxu0 0.0
    %796 = vmatpush1.msra.mxu0 0.0
    %797 = vmatprep.subr.mxu0 0.0
    %798 = vmatpush1.msra.mxu0 0.0
    %799 = vmatprep.subr.mxu0 0.0
    %800 = vmatpush1.msra.mxu0 0.0
    %801 = vmatprep.subr.mxu0 0.0
    %802 = vmatpush1.msra.mxu0 0.0
    %803 = vmatprep.subr.mxu0 0.0
    %804 = vmatpush1.msra.mxu0 0.0
    %805 = vmatprep.subr.mxu0 0.0
    %806 = vmatpush1.msra.mxu0 %v36
    %807 = vmatprep.subr.mxu0 0.0
    %808 = vmatpush1.msra.mxu0 %v35
    %809 = vmatprep.subr.mxu0 0.0
    %810 = vmatpush1.msra.mxu0 %v34
    %811 = vmatprep.subr.mxu0 0.0
    %812 = vmatpush1.msra.mxu0 %v33
    %813 = vmatprep.subr.mxu0 0.0
    %814 = vmatpush2.msra.mxu0 0.0
    %815 = vmatprep.subr.mxu0 0.0
    %816 = vmatpush2.msra.mxu0 0.0
    %817 = vmatprep.subr.mxu0 0.0
    %818 = vmatpush2.msra.mxu0 0.0
    %819 = vmatprep.subr.mxu0 0.0
    %820 = vmatpush2.msra.mxu0 0.0
    %821 = vmatprep.subr.mxu0 0.0
    %822 = vmatpush2.msra.mxu0 0.0
    %823 = vmatprep.subr.mxu0 0.0
    %824 = vmatpush2.msra.mxu0 0.0
    %825 = vmatprep.subr.mxu0 0.0
    %826 = vmatpush2.msra.mxu0 0.0
    %827 = vmatprep.subr.mxu0 0.0
    %828 = vmatpush2.msra.mxu0 0.0
    %829 = vmatprep.subr.mxu0 0.0
    %830 = vmatpush2.msra.mxu0 0.0
    %831 = vmatprep.subr.mxu0 0.0
    %832 = vmatpush2.msra.mxu0 0.0
    %833 = vmatprep.subr.mxu0 0.0
    %834 = vmatpush2.msra.mxu0 0.0
    %835 = vmatprep.subr.mxu0 0.0
    %836 = vmatpush2.msra.mxu0 0.0
    %837 = vmatprep.subr.mxu0 0.0
    %838 = vmatpush2.msra.mxu0 0.0
    %839 = vmatprep.subr.mxu0 0.0
    %840 = vmatpush2.msra.mxu0 0.0
    %841 = vmatprep.subr.mxu0 0.0
    %842 = vmatpush2.msra.mxu0 0.0
    %843 = vmatprep.subr.mxu0 0.0
    %844 = vmatpush2.msra.mxu0 0.0
    %845 = vmatprep.mubr.f32.mxu0 0.0
    %846 = vmatmul.mubr.f32.gmra.mxu0 %v779
    %v847 = vpop.f32.mrf.mxu0
    %v848 = vadd.f32 0.0, %v847
    %v849 = vpop.f32.mrf.mxu0
    %850 = vdwg.mxu0
    %v851 = vadd.f32 %v778, %v848
    %v852 = vxor.u32 %v851, 2147483648
    %v853 = vmul.f32 %v852, 1.442695
    %v854 = vpow.pop %v853
    %v855 = vadd.f32 %v854, 1.0
    %v856 = vrcp.pop %v855
    %v857 = vmul.f32 1.0, %v856
    %v858 = vtanh.pop %v851
    %v859 = vmul.f32 %v857, %v764
    %861 = vrot.lane.b32.xlu0 %v858, 64
    %v862 = vpop.permute.xlu0 %861
    %v864 = vmul.f32 %v857, %v862
    %866 = vrot.lane.b32.xlu0 %v864, 32
    %v867 = vpop.permute.xlu0 %866
    %v869 = vadd.f32 %v859, %v867
    %v870 = vtanh.pop %v869
    %872 = vrot.lane.b32.xlu0 %v870, 64
    %v873 = vpop.permute.xlu0 %872
    %v875 = vmul.f32 %v857, %v873
    %877 = vrot.lane.b32.xlu0 %v875, 32
    %v878 = vpop.permute.xlu0 %877
    %s880 = scalar_lea.vmem [#allocation2], 56
    %881 = vst.msk [vmem:[%s880] sm:$0xff] %vm43, %v878
    %v882 = vld [vmem:[#allocation2] sm:$0xff]
    %v883 = vld [vmem:[#allocation2 + $0x8] sm:$0xff]
    %v884 = vld [vmem:[#allocation2 + $0x10] sm:$0xff]
    %v885 = vld [vmem:[#allocation2 + $0x18] sm:$0xff]
    %v886 = vld [vmem:[#allocation2 + $0x20] sm:$0xff]
    %v887 = vld [vmem:[#allocation2 + $0x28] sm:$0xff]
    %v888 = vld [vmem:[#allocation2 + $0x30] sm:$0xff]
    %v889 = vld [vmem:[#allocation2 + $0x38] sm:$0xff]
    %v891 = vlaneseq
    %v892 = vshrl.u32 %v891, 7
    %v893 = vsub.s32 0, %v892
    %v894 = vrot.slane %v41, %v893
    %v897 = vsel %vm43, %v882, 0
    %v900 = vsel %vm43, %v883, 0
    %v903 = vsel %vm43, %v884, 0
    %v906 = vsel %vm43, %v885, 0
    %v909 = vsel %vm43, %v886, 0
    %v912 = vsel %vm43, %v887, 0
    %v915 = vsel %vm43, %v888, 0
    %v918 = vsel %vm43, %v889, 0
    %920 = vmatprep.subr.mxu0 0.0
    %921 = vmatpush1.msra.mxu0 0.0
    %922 = vmatprep.subr.mxu0 0.0
    %923 = vmatpush1.msra.mxu0 0.0
    %924 = vmatprep.subr.mxu0 0.0
    %925 = vmatpush1.msra.mxu0 0.0
    %926 = vmatprep.subr.mxu0 0.0
    %927 = vmatpush1.msra.mxu0 0.0
    %928 = vmatprep.subr.mxu0 0.0
    %929 = vmatpush1.msra.mxu0 0.0
    %930 = vmatprep.subr.mxu0 0.0
    %931 = vmatpush1.msra.mxu0 0.0
    %932 = vmatprep.subr.mxu0 0.0
    %933 = vmatpush1.msra.mxu0 0.0
    %934 = vmatprep.subr.mxu0 0.0
    %935 = vmatpush1.msra.mxu0 0.0
    %936 = vmatprep.subr.mxu0 0.0
    %937 = vmatpush1.msra.mxu0 0.0
    %938 = vmatprep.subr.mxu0 0.0
    %939 = vmatpush1.msra.mxu0 0.0
    %940 = vmatprep.subr.mxu0 0.0
    %941 = vmatpush1.msra.mxu0 0.0
    %942 = vmatprep.subr.mxu0 0.0
    %943 = vmatpush1.msra.mxu0 0.0
    %944 = vmatprep.subr.mxu0 0.0
    %945 = vmatpush1.msra.mxu0 %v40
    %946 = vmatprep.subr.mxu0 0.0
    %947 = vmatpush1.msra.mxu0 %v39
    %948 = vmatprep.subr.mxu0 0.0
    %949 = vmatpush1.msra.mxu0 %v38
    %950 = vmatprep.subr.mxu0 0.0
    %951 = vmatpush1.msra.mxu0 %v37
    %952 = vmatprep.subr.mxu0 0.0
    %953 = vmatpush2.msra.mxu0 0.0
    %954 = vmatprep.subr.mxu0 0.0
    %955 = vmatpush2.msra.mxu0 0.0
    %956 = vmatprep.subr.mxu0 0.0
    %957 = vmatpush2.msra.mxu0 0.0
    %958 = vmatprep.subr.mxu0 0.0
    %959 = vmatpush2.msra.mxu0 0.0
    %960 = vmatprep.subr.mxu0 0.0
    %961 = vmatpush2.msra.mxu0 0.0
    %962 = vmatprep.subr.mxu0 0.0
    %963 = vmatpush2.msra.mxu0 0.0
    %964 = vmatprep.subr.mxu0 0.0
    %965 = vmatpush2.msra.mxu0 0.0
    %966 = vmatprep.subr.mxu0 0.0
    %967 = vmatpush2.msra.mxu0 0.0
    %968 = vmatprep.subr.mxu0 0.0
    %969 = vmatpush2.msra.mxu0 0.0
    %970 = vmatprep.subr.mxu0 0.0
    %971 = vmatpush2.msra.mxu0 0.0
    %972 = vmatprep.subr.mxu0 0.0
    %973 = vmatpush2.msra.mxu0 0.0
    %974 = vmatprep.subr.mxu0 0.0
    %975 = vmatpush2.msra.mxu0 0.0
    %976 = vmatprep.subr.mxu0 0.0
    %977 = vmatpush2.msra.mxu0 0.0
    %978 = vmatprep.subr.mxu0 0.0
    %979 = vmatpush2.msra.mxu0 0.0
    %980 = vmatprep.subr.mxu0 0.0
    %981 = vmatpush2.msra.mxu0 0.0
    %982 = vmatprep.subr.mxu0 0.0
    %983 = vmatpush2.msra.mxu0 0.0
    %984 = vmatprep.mubr.f32.mxu0 0.0
    %985 = vmatmul.mubr.f32.gmra.mxu0 %v897
    %v986 = vpop.f32.mrf.mxu0
    %v987 = vadd.f32 %v894, %v986
    %v988 = vpop.f32.mrf.mxu0
    %989 = vmatprep.mubr.f32.mxu0 0.0
    %990 = vmatmul.mubr.f32.gmra.mxu0 %v900
    %v991 = vpop.f32.mrf.mxu0
    %v992 = vadd.f32 %v894, %v991
    %v993 = vpop.f32.mrf.mxu0
    %994 = vmatprep.mubr.f32.mxu0 0.0
    %995 = vmatmul.mubr.f32.gmra.mxu0 %v903
    %v996 = vpop.f32.mrf.mxu0
    %v997 = vadd.f32 %v894, %v996
    %v998 = vpop.f32.mrf.mxu0
    %999 = vmatprep.mubr.f32.mxu0 0.0
    %1000 = vmatmul.mubr.f32.gmra.mxu0 %v906
    %v1001 = vpop.f32.mrf.mxu0
    %v1002 = vadd.f32 %v894, %v1001
    %v1003 = vpop.f32.mrf.mxu0
    %1004 = vmatprep.mubr.f32.mxu0 0.0
    %1005 = vmatmul.mubr.f32.gmra.mxu0 %v909
    %v1006 = vpop.f32.mrf.mxu0
    %v1007 = vadd.f32 %v894, %v1006
    %v1008 = vpop.f32.mrf.mxu0
    %1009 = vmatprep.mubr.f32.mxu0 0.0
    %1010 = vmatmul.mubr.f32.gmra.mxu0 %v912
    %v1011 = vpop.f32.mrf.mxu0
    %v1012 = vadd.f32 %v894, %v1011
    %v1013 = vpop.f32.mrf.mxu0
    %1014 = vmatprep.mubr.f32.mxu0 0.0
    %1015 = vmatmul.mubr.f32.gmra.mxu0 %v915
    %v1016 = vpop.f32.mrf.mxu0
    %v1017 = vadd.f32 %v894, %v1016
    %v1018 = vpop.f32.mrf.mxu0
    %1019 = vmatprep.mubr.f32.mxu0 0.0
    %1020 = vmatmul.mubr.f32.gmra.mxu0 %v918
    %v1021 = vpop.f32.mrf.mxu0
    %v1022 = vadd.f32 %v894, %v1021
    %v1023 = vpop.f32.mrf.mxu0
    %1024 = vdwg.mxu0
    %vm1025 = vcmask 7168
    %1026 = vst.msk [vmem:[%s4] sm:$0xff] %vm1025, %v987
    %1027 = vst.msk [vmem:[%s4 + $0x8] sm:$0xff] %vm1025, %v992
    %1028 = vst.msk [vmem:[%s4 + $0x10] sm:$0xff] %vm1025, %v997
    %1029 = vst.msk [vmem:[%s4 + $0x18] sm:$0xff] %vm1025, %v1002
    %1030 = vst.msk [vmem:[%s4 + $0x20] sm:$0xff] %vm1025, %v1007
    %1031 = vst.msk [vmem:[%s4 + $0x28] sm:$0xff] %vm1025, %v1012
    %1032 = vst.msk [vmem:[%s4 + $0x30] sm:$0xff] %vm1025, %v1017
    %1033 = vst.msk [vmem:[%s4 + $0x38] sm:$0xff] %vm1025, %v1022
    // Predicated region
    $region22: #{tpu_custom_call.1} parent=1 // pred_check
      _
    $region23: #{tpu_custom_call.1} parent=1 // pred_check_branch
      %1035 = sbr.rel (0) target = $region25
    $region24: #{tpu_custom_call.1} parent=1 // pred_region
      _
    $region25: #{tpu_custom_call.1} parent=1 // pred_fallthru
      _
    // Predicated region
    $region26: #{tpu_custom_call.1} parent=1 // pred_check
      _
    $region27: #{tpu_custom_call.1} parent=1 // pred_check_branch
      %1037 = sbr.rel (0) target = $region29
    $region28: #{tpu_custom_call.1} parent=1 // pred_region
      _
    $region29: #{tpu_custom_call.1} parent=1 // pred_fallthru
      _
    %1038 = vsyncpa [#allocation5], 1

</llo_original>
